<compile_context>
chip_gen: v7x
topology: tpu7x:2x2x1
jax: 0.10.0
libtpu: 0.0.40
codegen_flags: <defaults>
</compile_context>

<pallas_src>
import jax
import jax.numpy as jnp
from jax.experimental import pallas as pl
from jax.experimental.pallas import tpu as pltpu


def _sentinel_kernel(s_ref, o_ref):
    # Minimal measurable work: copy one int32 scalar SMEM -> SMEM.
    # The reference forward() computes nothing, so nothing else belongs here.
    o_ref[0, 0] = s_ref[0, 0]


def _pallas_sentinel(sentinel: jax.Array) -> jax.Array:
    """Harness-only touch kernel on a (1, 1) int32 SMEM sentinel.

    TrainAbstractMetrics itself never calls this (its forward is a no-op by
    spec); it exists only so a Pallas kernel is defined and exercised once.
    """
    return pl.pallas_call(
        _sentinel_kernel,
        out_shape=jax.ShapeDtypeStruct((1, 1), jnp.int32),
        in_specs=[pl.BlockSpec(memory_space=pltpu.MemorySpace.SMEM)],
        out_specs=pl.BlockSpec(memory_space=pltpu.MemorySpace.SMEM),
        # Tell XLA's scheduler this custom call is free.
        cost_estimate=pl.CostEstimate(
            flops=0, bytes_accessed=0, transcendentals=0
        ),
    )(sentinel)


class TrainAbstractMetrics:
    """JAX/Pallas port of ConStruct's TrainAbstractMetrics.

    The PyTorch original is an abstract/no-op metrics container:
      - forward(masked_pred, masked_true, log) -> None
      - reset() -> None
      - log_epoch_metrics(current_epoch, local_rank) -> None

    The module path performs no device work at all: no pallas_call, no HBM
    traffic, no XLA custom-call launch.
    """

    def __init__(self):
        # No parameters / buffers in the reference __init__.
        pass

    def forward(self, masked_pred, masked_true, log: bool):
        # Reference forward body is `pass` — no compute to lower, no kernel
        # launched; returns None to match semantics exactly.
        return None

    def __call__(self, masked_pred, masked_true, log: bool):
        return self.forward(masked_pred, masked_true, log)

    def reset(self):
        pass

    def log_epoch_metrics(self, current_epoch, local_rank):
        return None


if __name__ == "__main__":
    key = jax.random.PRNGKey(0)
    k1, k2 = jax.random.split(key)

    # Small shapes consistent with masked node predictions:
    # (batch=2, n_nodes=8, hidden=32)
    shape = (2, 8, 32)
    masked_pred = jax.random.normal(k1, shape, dtype=jnp.float32)
    masked_true = jax.random.normal(k2, shape, dtype=jnp.float32)

    metrics = TrainAbstractMetrics()

    # Exact reference semantics: forward is a no-op and returns None,
    # without launching any kernel.
    result = metrics(masked_pred, masked_true, log=True)
    assert result is None
    metrics.reset()
    assert metrics.log_epoch_metrics(current_epoch=0, local_rank=0) is None

    # Harness requirement: define and run a Pallas kernel once.  The big
    # metric tensors are deliberately NOT operands — only a 4-byte sentinel.
    sentinel = jnp.array([[42]], dtype=jnp.int32)
    out = _pallas_sentinel(sentinel)
    jax.block_until_ready(out)
    assert int(out[0, 0]) == 42

    # The module left its inputs untouched (it never bound them to a kernel).
    assert masked_pred.shape == shape and masked_true.shape == shape

    print("KERNEL_OK")
</pallas_src>

<mosaic_0001>
module attributes {stable_mosaic.version = 11 : i64} {
  func.func @_sentinel_kernel(%arg0: memref<1x1xi32, #tpu.memory_space<smem>>, %arg1: memref<1x1xi32, #tpu.memory_space<smem>>) attributes {dimension_semantics = [], scalar_prefetch = 0 : i64, scratch_operands = 0 : i64, tpu.core_type = #tpu.core_type<tc>} {
    %c0 = arith.constant 0 : index
    %c0_0 = arith.constant 0 : index
    %0 = memref.load %arg0[%c0, %c0_0] : memref<1x1xi32, #tpu.memory_space<smem>>
    %c0_1 = arith.constant 0 : index
    %c0_2 = arith.constant 0 : index
    %1 = memref.load %arg1[%c0_1, %c0_2] : memref<1x1xi32, #tpu.memory_space<smem>>
    memref.store %0, %arg1[%c0_1, %c0_2] : memref<1x1xi32, #tpu.memory_space<smem>>
    return
  }
}

</mosaic_0001>

<llo_original>
// kernel: tpu_custom_call.1
$region0: #{tpu_custom_call.1}
  #allocation0 [shape = 'u32[]', space=smem, size = 0x4, offset = 0x4, fixed_abs, tag = 'smem constant byte address 0x4 - core index']
  #allocation1 [shape = 'u32[144,128]{1,0:T(1,128)}', space=vmem, size = 0x12000, scoped, tag = 'internal scratch']
  #allocation2 [shape = 's32[1,1]{1,0:T(1,128)S(6)}', space=smem, size = 0x200, scoped, tag = 'scoped memory for tpu_custom_call.1']
  %s0 = inlined_call_operand.<no memory space> [shape: s32[1,1], index: 0, kind: input, shape index: {}]
  %s1 = inlined_call_operand.hbm [shape: s32[1,1], index: 1, kind: output, shape index: {}]
  %s2 = sld [smem:[#allocation0]]
  $region14: #{tpu_custom_call.1} parent=0
    _
  %s4 = ssub.s32 1, %s2
  %s5 = scalar_select 0, %s4, %s2
  %6 = sst [smem:[#allocation2]] %s0
  $region1: #{tpu_custom_call.1} parent=0
    #allocation3 [shape = 'u8[512]{0}', space=smem, size = 0x200, scoped, tag = 'output window, operand 0, single buffered']
    #allocation4 [shape = 's32[1]{0}', space=sflag, size = 0x4, scoped, tag = 'scoped memory for tpu_custom_call.1']
    %7 = vsyncpa [#allocation4], 0
    // Predicated region
    $region2: #{tpu_custom_call.1} parent=1 // pred_check
      _
    $region3: #{tpu_custom_call.1} parent=1 // pred_check_branch
      %9 = sbr.rel (0) target = $region5
    $region4: #{tpu_custom_call.1} parent=1 // pred_region
      _
    $region5: #{tpu_custom_call.1} parent=1 // pred_fallthru
      _
    %s10 = sld [smem:[#allocation2]]
    %s11 = scalar_lea.smem [#allocation3], 0
    %12 = sst [smem:[%s11]] %s10
    // Predicated region
    $region6: #{tpu_custom_call.1} parent=1 // pred_check
      _
    $region7: #{tpu_custom_call.1} parent=1 // pred_check_branch
      %14 = sbr.rel (0) target = $region9
    $region8: #{tpu_custom_call.1} parent=1 // pred_region
      %s16 = ssub.s32 16, 16
      %17 = vsyncadd [#allocation4], %s16
      %20 = dma.smem_to_hbm [#allocation3], 16, %s1, [#allocation4]
    $region9: #{tpu_custom_call.1} parent=1 // pred_fallthru
      _
    // Predicated region
    $region10: #{tpu_custom_call.1} parent=1 // pred_check
      _
    $region11: #{tpu_custom_call.1} parent=1 // pred_check_branch
      %22 = sbr.rel (0) target = $region13
    $region12: #{tpu_custom_call.1} parent=1 // pred_region
      %23 = dma.done [#allocation4], 16
    $region13: #{tpu_custom_call.1} parent=1 // pred_fallthru
      _
    %24 = sfence
    %25 = vsyncpa [#allocation4], 1

</llo_original>
